<compile_context>
chip_gen: v7x
topology: tpu7x:2x2x1
jax: 0.10.0
libtpu: 0.0.40
codegen_flags: <defaults>
</compile_context>

<pallas_src>
import jax
import jax.numpy as jnp
from jax.experimental import pallas as pl
from jax.experimental.pallas import tpu as pltpu

_EPS = 1e-5
_NEG_SLOPE = 0.01                      # torch.nn.LeakyReLU() default
_VMEM_LIMIT = 32 * 1024 * 1024         # explicit scoped-VMEM budget (safe on v5e/v6e/v7x)


def _build_folded_weight(weight_hwio, W, dtype):
    """Fold the 3 kw taps AND the reflect-W padding into a block-Toeplitz matrix,
    stacking the 3 kh taps along K:

        wk[kh*(W*Cin) + j*Cin + ci,  w*Cout + co]  +=  weight[kh, kw, ci, co]
            where j = reflect(w - 1 + kw)  (reflect: -1 -> 1, W -> W-2)

    Overlapping reflect taps (w = 0 / w = W-1) sum into a single coefficient.
    """
    _, _, Cin, Cout = weight_hwio.shape
    wf = weight_hwio.astype(jnp.float32)
    j_idx = jnp.arange(W)                                    # source input column
    w_idx = jnp.arange(W)                                    # output column
    blocks = []
    for kh in range(3):
        m = jnp.zeros((W, Cin, W, Cout), jnp.float32)
        for kw in range(3):
            src = w_idx - 1 + kw
            src = jnp.where(src < 0, -src, src)              # reflect -1 -> 1
            src = jnp.where(src > W - 1, 2 * (W - 1) - src, src)   # reflect W -> W-2
            sel = (j_idx[:, None] == src[None, :]).astype(jnp.float32)   # (W_j, W_w)
            m = m + sel[:, None, :, None] * wf[kh, kw][None, :, None, :]
        blocks.append(m.reshape(W * Cin, W * Cout))
    return jnp.concatenate(blocks, axis=0).astype(dtype)     # (3*W*Cin, W*Cout)


def downsample_conv_block(x_nchw, weight_hwio, gamma, beta,
                          compute_dtype=jnp.bfloat16):
    """Forward pass of DownSampleConv_Block.

    x_nchw      : (N, Cin, H, W) float32 (NCHW, as in PyTorch)
    weight_hwio : (3, 3, Cin, Cout) conv weight (HWIO layout)
    gamma, beta : (Cout,) BatchNorm affine parameters
    compute_dtype: matmul input dtype (bf16 on all TPU generations; the MXU
                   accumulates in f32 and all BN / LeakyReLU math is f32).
    """
    N, Cin, H, W = x_nchw.shape
    Cout = weight_hwio.shape[-1]
    assert H >= 2 and W >= 2, "reflect padding (pad=1) needs H, W >= 2"

    WC_in = W * Cin                      # flattened input row width
    WC_out = W * Cout                    # flattened output row width (lane axis)
    K = 3 * WC_in                        # merged matmul contraction (3 kh taps)
    M = N * H                            # batch folded into the matmul M axis

    # Single real HBM pass over the input: NCHW -> channels-last, row-flattened
    # (N*H, W*Cin) slab, cast to the matmul dtype (reshapes are free).
    x2 = jnp.transpose(x_nchw, (0, 2, 3, 1)).reshape(M, WC_in).astype(compute_dtype)

    # Tiny constants built once in the wrapper.
    wk = _build_folded_weight(weight_hwio, W, compute_dtype)        # (K, WC_out)
    r = jnp.tile(jnp.eye(Cout, dtype=jnp.float32), (W, 1))          # (WC_out, Cout): lane -> channel
    rt = jnp.transpose(r)                                           # (Cout, WC_out): channel -> lane
    g2 = gamma.astype(jnp.float32).reshape(1, Cout)
    b2 = beta.astype(jnp.float32).reshape(1, Cout)

    inv_count = 1.0 / float(N * H * W)                              # training-mode (biased) BN

    # VMEM budget sanity: everything is resident in the single grid step.
    # (For much larger shapes, tile over N / H instead; not needed here.)
    itemsize = jnp.dtype(compute_dtype).itemsize
    vmem_est = (2 * (x2.size + wk.size) * itemsize                  # double-buffered inputs
                + 2 * (r.size + rt.size + g2.size + b2.size) * 4
                + M * K * itemsize                                  # staging scratch
                + 2 * M * WC_out * 4)                               # resident output
    assert vmem_est < 24 * 1024 * 1024, (
        f"problem too large for the single-step fused kernel (~{vmem_est} B VMEM); "
        "tile over N / H for larger shapes")

    def kernel(x_ref, wk_ref, r_ref, rt_ref, g_ref, b_ref, o_ref, xs_ref):
        # ---- stage the merged-K LHS: [row h-1 | row h | row h+1] per image ----
        # Reflect-H is handled here (row -1 -> 1, row H -> H-2); reflect-W lives
        # in the folded weight.  All slices are static -> aligned bulk copies.
        for n in range(N):                                   # static unroll
            a = n * H
            img = x_ref[a:a + H, :]                           # (H, W*Cin)
            xs_ref[a:a + H, WC_in:2 * WC_in] = img                        # kh = 1 (center)
            xs_ref[a + 1:a + H, 0:WC_in] = img[:H - 1, :]                 # kh = 0 (row h-1)
            xs_ref[a:a + 1, 0:WC_in] = img[1:2, :]                        #   reflect row -1
            xs_ref[a:a + H - 1, 2 * WC_in:] = img[1:, :]                  # kh = 2 (row h+1)
            xs_ref[a + H - 1:a + H, 2 * WC_in:] = img[H - 2:H - 1, :]     #   reflect row H

        # ---- conv: ONE MXU matmul, (N*H, 3*W*Cin) x (3*W*Cin, W*Cout) ----
        acc = jnp.dot(xs_ref[...], wk_ref[...],
                      preferred_element_type=jnp.float32)     # (N*H, WC_out) f32

        # ---- training-mode BatchNorm statistics over all of (N, H, W) ----
        s1 = jnp.sum(acc, axis=0, keepdims=True)              # (1, WC_out)
        s2 = jnp.sum(acc * acc, axis=0, keepdims=True)
        s12 = jnp.concatenate([s1, s2], axis=0)               # (2, WC_out)
        sums_c = jnp.dot(s12, r_ref[...],
                         preferred_element_type=jnp.float32)  # (2, Cout): [sum, sumsq]
        mean = sums_c[0:1, :] * inv_count
        var = jnp.maximum(sums_c[1:2, :] * inv_count - mean * mean, 0.0)
        scale_c = g_ref[...] * jax.lax.rsqrt(var + _EPS)       # (1, Cout)
        shift_c = b_ref[...] - mean * scale_c
        ss_c = jnp.concatenate([scale_c, shift_c], axis=0)     # (2, Cout)
        ss_l = jnp.dot(ss_c, rt_ref[...],
                       preferred_element_type=jnp.float32)     # (2, WC_out) lane layout

        # ---- BN affine + LeakyReLU, single lane-dense writeback ----
        z = acc * ss_l[0:1, :] + ss_l[1:2, :]
        o_ref[...] = jnp.where(z >= 0, z, _NEG_SLOPE * z)

    out2 = pl.pallas_call(
        kernel,
        out_shape=jax.ShapeDtypeStruct((M, WC_out), jnp.float32),
        grid=(1,),
        in_specs=[
            pl.BlockSpec((M, WC_in), lambda i: (0, 0)),
            pl.BlockSpec((K, WC_out), lambda i: (0, 0)),
            pl.BlockSpec((WC_out, Cout), lambda i: (0, 0)),
            pl.BlockSpec((Cout, WC_out), lambda i: (0, 0)),
            pl.BlockSpec((1, Cout), lambda i: (0, 0)),
            pl.BlockSpec((1, Cout), lambda i: (0, 0)),
        ],
        out_specs=pl.BlockSpec((M, WC_out), lambda i: (0, 0)),
        scratch_shapes=[pltpu.VMEM((M, K), compute_dtype)],
        compiler_params=pltpu.CompilerParams(
            dimension_semantics=("arbitrary",),
            vmem_limit_bytes=_VMEM_LIMIT),
    )(x2, wk, r, rt, g2, b2)

    # Back to NCHW to match the PyTorch module (reshape free, one transpose pass,
    # fused by XLA with the copy out of the custom call).
    return jnp.transpose(out2.reshape(N, H, W, Cout), (0, 3, 1, 2))


def _reference(x_nchw, weight_hwio, gamma, beta, compute_dtype=jnp.bfloat16):
    """Pure-JAX reference with the same numerical policy as the kernel
    (conv inputs rounded to compute_dtype, all accumulation / BN math in f32)."""
    xr = x_nchw.astype(compute_dtype).astype(jnp.float32)
    wr = weight_hwio.astype(compute_dtype).astype(jnp.float32)
    w_oihw = jnp.transpose(wr, (3, 2, 0, 1))                 # (Cout, Cin, 3, 3)
    x_pad = jnp.pad(xr, ((0, 0), (0, 0), (1, 1), (1, 1)), mode="reflect")
    y = jax.lax.conv_general_dilated(
        x_pad, w_oihw, window_strides=(1, 1), padding="VALID",
        dimension_numbers=("NCHW", "OIHW", "NCHW"))
    mean = jnp.mean(y, axis=(0, 2, 3), keepdims=True)
    var = jnp.mean((y - mean) ** 2, axis=(0, 2, 3), keepdims=True)
    yhat = (y - mean) * jax.lax.rsqrt(var + _EPS)
    yhat = gamma.reshape(1, -1, 1, 1) * yhat + beta.reshape(1, -1, 1, 1)
    return jnp.where(yhat >= 0, yhat, _NEG_SLOPE * yhat)


if __name__ == "__main__":
    key = jax.random.PRNGKey(0)
    N, Cin, Cout, H, W = 2, 4, 8, 16, 16

    kx, kw_key = jax.random.split(key)
    x = jax.random.normal(kx, (N, Cin, H, W), dtype=jnp.float32)
    # Deterministic conv weight (kaiming-uniform-like scale), HWIO layout.
    fan_in = Cin * 3 * 3
    bound = (1.0 / fan_in) ** 0.5
    weight = jax.random.uniform(kw_key, (3, 3, Cin, Cout), jnp.float32, -bound, bound)
    gamma = jnp.ones((Cout,), jnp.float32)   # nn.BatchNorm2d default weight
    beta = jnp.zeros((Cout,), jnp.float32)   # nn.BatchNorm2d default bias

    fwd = jax.jit(downsample_conv_block)
    out = jax.block_until_ready(fwd(x, weight, gamma, beta))

    ref = _reference(x, weight, gamma, beta)
    assert out.shape == (N, Cout, H, W)
    err = float(jnp.max(jnp.abs(out - ref)))
    # Tolerance: the reflect-W fold sums the kw=0 / kw=2 taps into ONE bf16
    # coefficient at output columns 0 and W-1, whereas the reference keeps the
    # two bf16 taps separate (f32 accumulation).  That one-extra-rounding
    # difference (+ one-pass variance and accumulation order) is a few 1e-3
    # after BN normalization; everything else is bit-equivalent in policy.
    assert err < 1e-2, f"max abs err vs reference: {err}"
    print("KERNEL_OK")
</pallas_src>

<mosaic_0001>
module attributes {stable_mosaic.version = 11 : i64} {
  func.func @kernel(%arg0: i32, %arg1: memref<32x64xbf16, #tpu.memory_space<vmem>>, %arg2: memref<192x128xbf16, #tpu.memory_space<vmem>>, %arg3: memref<128x8xf32, #tpu.memory_space<vmem>>, %arg4: memref<8x128xf32, #tpu.memory_space<vmem>>, %arg5: memref<1x8xf32, #tpu.memory_space<vmem>>, %arg6: memref<1x8xf32, #tpu.memory_space<vmem>>, %arg7: memref<32x128xf32, #tpu.memory_space<vmem>>, %arg8: memref<32x192xbf16, #tpu.memory_space<vmem>>) attributes {dimension_semantics = [#tpu.dimension_semantics<arbitrary>], iteration_bounds = array<i64: 1>, scalar_prefetch = 0 : i64, scratch_operands = 1 : i64, tpu.core_type = #tpu.core_type<tc>, window_params = [{pipeline_mode = #tpu.pipeline_mode<synchronous>, transform_indices = @transform_0, window_bounds = array<i64: 32, 64>}, {pipeline_mode = #tpu.pipeline_mode<synchronous>, transform_indices = @transform_1, window_bounds = array<i64: 192, 128>}, {pipeline_mode = #tpu.pipeline_mode<synchronous>, transform_indices = @transform_2, window_bounds = array<i64: 128, 8>}, {pipeline_mode = #tpu.pipeline_mode<synchronous>, transform_indices = @transform_3, window_bounds = array<i64: 8, 128>}, {pipeline_mode = #tpu.pipeline_mode<synchronous>, transform_indices = @transform_4, window_bounds = array<i64: 1, 8>}, {pipeline_mode = #tpu.pipeline_mode<synchronous>, transform_indices = @transform_5, window_bounds = array<i64: 1, 8>}, {pipeline_mode = #tpu.pipeline_mode<synchronous>, transform_indices = @transform_6, window_bounds = array<i64: 32, 128>}]} {
    %c0 = arith.constant 0 : index
    %c0_0 = arith.constant 0 : index
    %0 = vector.load %arg1[%c0, %c0_0] : memref<32x64xbf16, #tpu.memory_space<vmem>>, vector<16x64xbf16>
    %c0_1 = arith.constant 0 : index
    %c64 = arith.constant 64 : index
    %1 = vector.load %arg8[%c0_1, %c64] : memref<32x192xbf16, #tpu.memory_space<vmem>>, vector<16x64xbf16>
    tpu.vector_store %arg8[%c0_1, %c64], %0 {strides = array<i32>} : memref<32x192xbf16, #tpu.memory_space<vmem>>, vector<16x64xbf16>,
    %2 = vector.extract_strided_slice %0 {offsets = [0, 0], sizes = [15, 64], strides = [1, 1]} : vector<16x64xbf16> to vector<15x64xbf16>
    %c1 = arith.constant 1 : index
    %c0_2 = arith.constant 0 : index
    %3 = vector.load %arg8[%c1, %c0_2] : memref<32x192xbf16, #tpu.memory_space<vmem>>, vector<15x64xbf16>
    tpu.vector_store %arg8[%c1, %c0_2], %2 {strides = array<i32>} : memref<32x192xbf16, #tpu.memory_space<vmem>>, vector<15x64xbf16>,
    %4 = vector.extract_strided_slice %0 {offsets = [1, 0], sizes = [1, 64], strides = [1, 1]} : vector<16x64xbf16> to vector<1x64xbf16>
    %c0_3 = arith.constant 0 : index
    %c0_4 = arith.constant 0 : index
    %5 = vector.load %arg8[%c0_3, %c0_4] : memref<32x192xbf16, #tpu.memory_space<vmem>>, vector<1x64xbf16>
    tpu.vector_store %arg8[%c0_3, %c0_4], %4 {strides = array<i32>} : memref<32x192xbf16, #tpu.memory_space<vmem>>, vector<1x64xbf16>,
    %6 = vector.extract_strided_slice %0 {offsets = [1, 0], sizes = [15, 64], strides = [1, 1]} : vector<16x64xbf16> to vector<15x64xbf16>
    %c0_5 = arith.constant 0 : index
    %c128 = arith.constant 128 : index
    %7 = vector.load %arg8[%c0_5, %c128] : memref<32x192xbf16, #tpu.memory_space<vmem>>, vector<15x64xbf16>
    tpu.vector_store %arg8[%c0_5, %c128], %6 {strides = array<i32>} : memref<32x192xbf16, #tpu.memory_space<vmem>>, vector<15x64xbf16>,
    %8 = vector.extract_strided_slice %0 {offsets = [14, 0], sizes = [1, 64], strides = [1, 1]} : vector<16x64xbf16> to vector<1x64xbf16>
    %c15 = arith.constant 15 : index
    %c128_6 = arith.constant 128 : index
    %9 = vector.load %arg8[%c15, %c128_6] : memref<32x192xbf16, #tpu.memory_space<vmem>>, vector<1x64xbf16>
    tpu.vector_store %arg8[%c15, %c128_6], %8 {strides = array<i32>} : memref<32x192xbf16, #tpu.memory_space<vmem>>, vector<1x64xbf16>,
    %c16 = arith.constant 16 : index
    %c0_7 = arith.constant 0 : index
    %10 = vector.load %arg1[%c16, %c0_7] : memref<32x64xbf16, #tpu.memory_space<vmem>>, vector<16x64xbf16>
    %c16_8 = arith.constant 16 : index
    %c64_9 = arith.constant 64 : index
    %11 = vector.load %arg8[%c16_8, %c64_9] : memref<32x192xbf16, #tpu.memory_space<vmem>>, vector<16x64xbf16>
    tpu.vector_store %arg8[%c16_8, %c64_9], %10 {strides = array<i32>} : memref<32x192xbf16, #tpu.memory_space<vmem>>, vector<16x64xbf16>,
    %12 = vector.extract_strided_slice %10 {offsets = [0, 0], sizes = [15, 64], strides = [1, 1]} : vector<16x64xbf16> to vector<15x64xbf16>
    %c17 = arith.constant 17 : index
    %c0_10 = arith.constant 0 : index
    %13 = vector.load %arg8[%c17, %c0_10] : memref<32x192xbf16, #tpu.memory_space<vmem>>, vector<15x64xbf16>
    tpu.vector_store %arg8[%c17, %c0_10], %12 {strides = array<i32>} : memref<32x192xbf16, #tpu.memory_space<vmem>>, vector<15x64xbf16>,
    %14 = vector.extract_strided_slice %10 {offsets = [1, 0], sizes = [1, 64], strides = [1, 1]} : vector<16x64xbf16> to vector<1x64xbf16>
    %c16_11 = arith.constant 16 : index
    %c0_12 = arith.constant 0 : index
    %15 = vector.load %arg8[%c16_11, %c0_12] : memref<32x192xbf16, #tpu.memory_space<vmem>>, vector<1x64xbf16>
    tpu.vector_store %arg8[%c16_11, %c0_12], %14 {strides = array<i32>} : memref<32x192xbf16, #tpu.memory_space<vmem>>, vector<1x64xbf16>,
    %16 = vector.extract_strided_slice %10 {offsets = [1, 0], sizes = [15, 64], strides = [1, 1]} : vector<16x64xbf16> to vector<15x64xbf16>
    %c16_13 = arith.constant 16 : index
    %c128_14 = arith.constant 128 : index
    %17 = vector.load %arg8[%c16_13, %c128_14] : memref<32x192xbf16, #tpu.memory_space<vmem>>, vector<15x64xbf16>
    tpu.vector_store %arg8[%c16_13, %c128_14], %16 {strides = array<i32>} : memref<32x192xbf16, #tpu.memory_space<vmem>>, vector<15x64xbf16>,
    %18 = vector.extract_strided_slice %10 {offsets = [14, 0], sizes = [1, 64], strides = [1, 1]} : vector<16x64xbf16> to vector<1x64xbf16>
    %c31 = arith.constant 31 : index
    %c128_15 = arith.constant 128 : index
    %19 = vector.load %arg8[%c31, %c128_15] : memref<32x192xbf16, #tpu.memory_space<vmem>>, vector<1x64xbf16>
    tpu.vector_store %arg8[%c31, %c128_15], %18 {strides = array<i32>} : memref<32x192xbf16, #tpu.memory_space<vmem>>, vector<1x64xbf16>,
    %c0_16 = arith.constant 0 : index
    %c0_17 = arith.constant 0 : index
    %20 = vector.load %arg8[%c0_16, %c0_17] : memref<32x192xbf16, #tpu.memory_space<vmem>>, vector<32x192xbf16>
    %c0_18 = arith.constant 0 : index
    %c0_19 = arith.constant 0 : index
    %21 = vector.load %arg2[%c0_18, %c0_19] : memref<192x128xbf16, #tpu.memory_space<vmem>>, vector<192x128xbf16>
    %cst = arith.constant dense<0.000000e+00> : vector<32x128xf32>
    %22 = tpu.matmul %20, %21, %cst {dimension_numbers = #tpu.dot_dimension_numbers<[1], [0], [0], [1], [0, 0, 1, 1], [], []>} : vector<32x192xbf16>, vector<192x128xbf16>, vector<32x128xf32> -> vector<32x128xf32>
    %cst_20 = arith.constant dense<0.000000e+00> : vector<128xf32>
    %23 = vector.multi_reduction <add>, %22, %cst_20 [0] : vector<32x128xf32> to vector<128xf32>
    %24 = vector.shape_cast %23 : vector<128xf32> to vector<1x128xf32>
    %25 = arith.mulf %22, %22 : vector<32x128xf32>
    %cst_21 = arith.constant dense<0.000000e+00> : vector<128xf32>
    %26 = vector.multi_reduction <add>, %25, %cst_21 [0] : vector<32x128xf32> to vector<128xf32>
    %27 = vector.shape_cast %26 : vector<128xf32> to vector<1x128xf32>
    %28 = tpu.concatenate %24, %27 in 0 : vector<1x128xf32>, vector<1x128xf32> -> vector<2x128xf32>
    %c0_22 = arith.constant 0 : index
    %c0_23 = arith.constant 0 : index
    %29 = vector.load %arg3[%c0_22, %c0_23] : memref<128x8xf32, #tpu.memory_space<vmem>>, vector<128x8xf32>
    %cst_24 = arith.constant dense<0.000000e+00> : vector<2x8xf32>
    %30 = tpu.matmul %28, %29, %cst_24 {dimension_numbers = #tpu.dot_dimension_numbers<[1], [0], [0], [1], [0, 0, 1, 1], [], []>} : vector<2x128xf32>, vector<128x8xf32>, vector<2x8xf32> -> vector<2x8xf32>
    %31 = vector.extract_strided_slice %30 {offsets = [0, 0], sizes = [1, 8], strides = [1, 1]} : vector<2x8xf32> to vector<1x8xf32>
    %cst_25 = arith.constant 0.001953125 : f32
    %32 = vector.broadcast %cst_25 : f32 to vector<1x8xf32>
    %33 = arith.mulf %31, %32 : vector<1x8xf32>
    %34 = vector.extract_strided_slice %30 {offsets = [1, 0], sizes = [1, 8], strides = [1, 1]} : vector<2x8xf32> to vector<1x8xf32>
    %cst_26 = arith.constant 0.001953125 : f32
    %35 = vector.broadcast %cst_26 : f32 to vector<1x8xf32>
    %36 = arith.mulf %34, %35 : vector<1x8xf32>
    %37 = arith.mulf %33, %33 : vector<1x8xf32>
    %38 = arith.subf %36, %37 : vector<1x8xf32>
    %cst_27 = arith.constant 0.000000e+00 : f32
    %39 = vector.broadcast %cst_27 : f32 to vector<1x8xf32>
    %40 = arith.maximumf %38, %39 : vector<1x8xf32>
    %c0_28 = arith.constant 0 : index
    %c0_29 = arith.constant 0 : index
    %41 = vector.load %arg5[%c0_28, %c0_29] : memref<1x8xf32, #tpu.memory_space<vmem>>, vector<1x8xf32>
    %cst_30 = arith.constant 9.99999974E-6 : f32
    %42 = vector.broadcast %cst_30 : f32 to vector<1x8xf32>
    %43 = arith.addf %40, %42 : vector<1x8xf32>
    %44 = math.rsqrt %43 : vector<1x8xf32>
    %45 = arith.mulf %41, %44 : vector<1x8xf32>
    %c0_31 = arith.constant 0 : index
    %c0_32 = arith.constant 0 : index
    %46 = vector.load %arg6[%c0_31, %c0_32] : memref<1x8xf32, #tpu.memory_space<vmem>>, vector<1x8xf32>
    %47 = arith.mulf %33, %45 : vector<1x8xf32>
    %48 = arith.subf %46, %47 : vector<1x8xf32>
    %49 = tpu.concatenate %45, %48 in 0 : vector<1x8xf32>, vector<1x8xf32> -> vector<2x8xf32>
    %c0_33 = arith.constant 0 : index
    %c0_34 = arith.constant 0 : index
    %50 = vector.load %arg4[%c0_33, %c0_34] : memref<8x128xf32, #tpu.memory_space<vmem>>, vector<8x128xf32>
    %cst_35 = arith.constant dense<0.000000e+00> : vector<2x128xf32>
    %51 = tpu.matmul %49, %50, %cst_35 {dimension_numbers = #tpu.dot_dimension_numbers<[1], [0], [0], [1], [0, 0, 1, 1], [], []>} : vector<2x8xf32>, vector<8x128xf32>, vector<2x128xf32> -> vector<2x128xf32>
    %52 = vector.extract_strided_slice %51 {offsets = [0, 0], sizes = [1, 128], strides = [1, 1]} : vector<2x128xf32> to vector<1x128xf32>
    %53 = vector.broadcast %52 : vector<1x128xf32> to vector<32x128xf32>
    %54 = arith.mulf %22, %53 : vector<32x128xf32>
    %55 = vector.extract_strided_slice %51 {offsets = [1, 0], sizes = [1, 128], strides = [1, 1]} : vector<2x128xf32> to vector<1x128xf32>
    %56 = vector.broadcast %55 : vector<1x128xf32> to vector<32x128xf32>
    %57 = arith.addf %54, %56 : vector<32x128xf32>
    %cst_36 = arith.constant 0.000000e+00 : f32
    %58 = vector.broadcast %cst_36 : f32 to vector<32x128xf32>
    %59 = arith.cmpf oge, %57, %58 : vector<32x128xf32>
    %cst_37 = arith.constant 0.00999999977 : f32
    %60 = vector.broadcast %cst_37 : f32 to vector<32x128xf32>
    %61 = arith.mulf %60, %57 : vector<32x128xf32>
    %62 = arith.select %59, %57, %61 : vector<32x128xi1>, vector<32x128xf32>
    %c0_38 = arith.constant 0 : index
    %c0_39 = arith.constant 0 : index
    %63 = vector.load %arg7[%c0_38, %c0_39] : memref<32x128xf32, #tpu.memory_space<vmem>>, vector<32x128xf32>
    tpu.vector_store %arg7[%c0_38, %c0_39], %62 {strides = array<i32>} : memref<32x128xf32, #tpu.memory_space<vmem>>, vector<32x128xf32>,
    return
  }
  func.func @transform_0(%arg0: i32) -> (i32, i32) {
    %c0_i32 = arith.constant 0 : i32
    %c0_i32_0 = arith.constant 0 : i32
    %c0_i32_1 = arith.constant 0 : i32
    return %c0_i32, %c0_i32_0 : i32, i32
  }
  func.func @transform_1(%arg0: i32) -> (i32, i32) {
    %c0_i32 = arith.constant 0 : i32
    %c0_i32_0 = arith.constant 0 : i32
    %c0_i32_1 = arith.constant 0 : i32
    return %c0_i32, %c0_i32_0 : i32, i32
  }
  func.func @transform_2(%arg0: i32) -> (i32, i32) {
    %c0_i32 = arith.constant 0 : i32
    %c0_i32_0 = arith.constant 0 : i32
    %c0_i32_1 = arith.constant 0 : i32
    return %c0_i32, %c0_i32_0 : i32, i32
  }
  func.func @transform_3(%arg0: i32) -> (i32, i32) {
    %c0_i32 = arith.constant 0 : i32
    %c0_i32_0 = arith.constant 0 : i32
    %c0_i32_1 = arith.constant 0 : i32
    return %c0_i32, %c0_i32_0 : i32, i32
  }
  func.func @transform_4(%arg0: i32) -> (i32, i32) {
    %c0_i32 = arith.constant 0 : i32
    %c0_i32_0 = arith.constant 0 : i32
    %c0_i32_1 = arith.constant 0 : i32
    return %c0_i32, %c0_i32_0 : i32, i32
  }
  func.func @transform_5(%arg0: i32) -> (i32, i32) {
    %c0_i32 = arith.constant 0 : i32
    %c0_i32_0 = arith.constant 0 : i32
    %c0_i32_1 = arith.constant 0 : i32
    return %c0_i32, %c0_i32_0 : i32, i32
  }
  func.func @transform_6(%arg0: i32) -> (i32, i32) {
    %c0_i32 = arith.constant 0 : i32
    %c0_i32_0 = arith.constant 0 : i32
    %c0_i32_1 = arith.constant 0 : i32
    return %c0_i32, %c0_i32_0 : i32, i32
  }
}

</mosaic_0001>

<llo_original>
// kernel: tile.9
$region0: #{tile.9}
  %s0 = inlined_call_operand.vmem [shape: f32[16,8,8], index: 0, kind: input, shape index: {}]
  %s1 = inlined_call_operand.vmem [shape: f32[128,8], index: 1, kind: output, shape index: {}]
  %s2 = smov 3
  %v3 = vld [vmem:[%s0] ss:$16 sm:%s2]
  %s4 = smov 12
  %v5 = vld [vmem:[%s0] ss:$16 sm:%s4]
  %vm6 = vcmask 1043458
  %v7 = vsel %vm6, %v5, %v3
  %s8 = smov 48
  %v9 = vld [vmem:[%s0] ss:$16 sm:%s8]
  %vm10 = vcmask 1045508
  %v11 = vsel %vm10, %v9, %v7
  %s12 = smov 192
  %v13 = vld [vmem:[%s0] ss:$16 sm:%s12]
  %vm14 = vcmask 1047558
  %v15 = vsel %vm14, %v13, %v11
  %vm16 = vcmask 64512
  %17 = vst.msk [vmem:[%s1] sm:$0xff] %vm16, %v15
  %s18 = scalar_lea.vmem %s0, 15
  %s19 = smov 3
  %v20 = vld [vmem:[%s18] ss:$16 sm:%s19]
  %s21 = scalar_lea.vmem %s0, 15
  %s22 = smov 12
  %v23 = vld [vmem:[%s21] ss:$16 sm:%s22]
  %vm24 = vcmask 1043458
  %v25 = vsel %vm24, %v23, %v20
  %s26 = scalar_lea.vmem %s0, 15
  %s27 = smov 48
  %v28 = vld [vmem:[%s26] ss:$16 sm:%s27]
  %vm29 = vcmask 1045508
  %v30 = vsel %vm29, %v28, %v25
  %s31 = scalar_lea.vmem %s0, 15
  %s32 = smov 192
  %v33 = vld [vmem:[%s31] ss:$16 sm:%s32]
  %vm34 = vcmask 1047558
  %v35 = vsel %vm34, %v33, %v30
  %36 = vrot.lane.b32.xlu0 %v35, 120
  %v37 = vpop.permute.xlu0 %36
  %vm38 = vcmask 1048512
  %39 = vst.msk [vmem:[%s1] sm:$0xff] %vm38, %v37
  %s40 = scalar_lea.vmem %s0, 14
  %s41 = smov 3
  %v42 = vld [vmem:[%s40] ss:$16 sm:%s41]
  %s43 = scalar_lea.vmem %s0, 14
  %s44 = smov 12
  %v45 = vld [vmem:[%s43] ss:$16 sm:%s44]
  %vm46 = vcmask 1043458
  %v47 = vsel %vm46, %v45, %v42
  %s48 = scalar_lea.vmem %s0, 14
  %s49 = smov 48
  %v50 = vld [vmem:[%s48] ss:$16 sm:%s49]
  %vm51 = vcmask 1045508
  %v52 = vsel %vm51, %v50, %v47
  %s53 = scalar_lea.vmem %s0, 14
  %s54 = smov 192
  %v55 = vld [vmem:[%s53] ss:$16 sm:%s54]
  %vm56 = vcmask 1047558
  %v57 = vsel %vm56, %v55, %v52
  %58 = vrot.lane.b32.xlu0 %v57, 112
  %v59 = vpop.permute.xlu0 %58
  %vm60 = vcmask 982912
  %61 = vst.msk [vmem:[%s1] sm:$0xff] %vm60, %v59
  %s62 = scalar_lea.vmem %s0, 13
  %s63 = smov 3
  %v64 = vld [vmem:[%s62] ss:$16 sm:%s63]
  %s65 = scalar_lea.vmem %s0, 13
  %s66 = smov 12
  %v67 = vld [vmem:[%s65] ss:$16 sm:%s66]
  %vm68 = vcmask 1043458
  %v69 = vsel %vm68, %v67, %v64
  %s70 = scalar_lea.vmem %s0, 13
  %s71 = smov 48
  %v72 = vld [vmem:[%s70] ss:$16 sm:%s71]
  %vm73 = vcmask 1045508
  %v74 = vsel %vm73, %v72, %v69
  %s75 = scalar_lea.vmem %s0, 13
  %s76 = smov 192
  %v77 = vld [vmem:[%s75] ss:$16 sm:%s76]
  %vm78 = vcmask 1047558
  %v79 = vsel %vm78, %v77, %v74
  %80 = vrot.lane.b32.xlu0 %v79, 104
  %v81 = vpop.permute.xlu0 %80
  %vm82 = vcmask 917312
  %83 = vst.msk [vmem:[%s1] sm:$0xff] %vm82, %v81
  %s84 = scalar_lea.vmem %s0, 12
  %s85 = smov 3
  %v86 = vld [vmem:[%s84] ss:$16 sm:%s85]
  %s87 = scalar_lea.vmem %s0, 12
  %s88 = smov 12
  %v89 = vld [vmem:[%s87] ss:$16 sm:%s88]
  %vm90 = vcmask 1043458
  %v91 = vsel %vm90, %v89, %v86
  %s92 = scalar_lea.vmem %s0, 12
  %s93 = smov 48
  %v94 = vld [vmem:[%s92] ss:$16 sm:%s93]
  %vm95 = vcmask 1045508
  %v96 = vsel %vm95, %v94, %v91
  %s97 = scalar_lea.vmem %s0, 12
  %s98 = smov 192
  %v99 = vld [vmem:[%s97] ss:$16 sm:%s98]
  %vm100 = vcmask 1047558
  %v101 = vsel %vm100, %v99, %v96
  %102 = vrot.lane.b32.xlu0 %v101, 96
  %v103 = vpop.permute.xlu0 %102
  %vm104 = vcmask 851712
  %105 = vst.msk [vmem:[%s1] sm:$0xff] %vm104, %v103
  %s106 = scalar_lea.vmem %s0, 11
  %s107 = smov 3
  %v108 = vld [vmem:[%s106] ss:$16 sm:%s107]
  %s109 = scalar_lea.vmem %s0, 11
  %s110 = smov 12
  %v111 = vld [vmem:[%s109] ss:$16 sm:%s110]
  %vm112 = vcmask 1043458
  %v113 = vsel %vm112, %v111, %v108
  %s114 = scalar_lea.vmem %s0, 11
  %s115 = smov 48
  %v116 = vld [vmem:[%s114] ss:$16 sm:%s115]
  %vm117 = vcmask 1045508
  %v118 = vsel %vm117, %v116, %v113
  %s119 = scalar_lea.vmem %s0, 11
  %s120 = smov 192
  %v121 = vld [vmem:[%s119] ss:$16 sm:%s120]
  %vm122 = vcmask 1047558
  %v123 = vsel %vm122, %v121, %v118
  %124 = vrot.lane.b32.xlu0 %v123, 88
  %v125 = vpop.permute.xlu0 %124
  %vm126 = vcmask 786112
  %127 = vst.msk [vmem:[%s1] sm:$0xff] %vm126, %v125
  %s128 = scalar_lea.vmem %s0, 10
  %s129 = smov 3
  %v130 = vld [vmem:[%s128] ss:$16 sm:%s129]
  %s131 = scalar_lea.vmem %s0, 10
  %s132 = smov 12
  %v133 = vld [vmem:[%s131] ss:$16 sm:%s132]
  %vm134 = vcmask 1043458
  %v135 = vsel %vm134, %v133, %v130
  %s136 = scalar_lea.vmem %s0, 10
  %s137 = smov 48
  %v138 = vld [vmem:[%s136] ss:$16 sm:%s137]
  %vm139 = vcmask 1045508
  %v140 = vsel %vm139, %v138, %v135
  %s141 = scalar_lea.vmem %s0, 10
  %s142 = smov 192
  %v143 = vld [vmem:[%s141] ss:$16 sm:%s142]
  %vm144 = vcmask 1047558
  %v145 = vsel %vm144, %v143, %v140
  %146 = vrot.lane.b32.xlu0 %v145, 80
  %v147 = vpop.permute.xlu0 %146
  %vm148 = vcmask 720512
  %149 = vst.msk [vmem:[%s1] sm:$0xff] %vm148, %v147
  %s150 = scalar_lea.vmem %s0, 9
  %s151 = smov 3
  %v152 = vld [vmem:[%s150] ss:$16 sm:%s151]
  %s153 = scalar_lea.vmem %s0, 9
  %s154 = smov 12
  %v155 = vld [vmem:[%s153] ss:$16 sm:%s154]
  %vm156 = vcmask 1043458
  %v157 = vsel %vm156, %v155, %v152
  %s158 = scalar_lea.vmem %s0, 9
  %s159 = smov 48
  %v160 = vld [vmem:[%s158] ss:$16 sm:%s159]
  %vm161 = vcmask 1045508
  %v162 = vsel %vm161, %v160, %v157
  %s163 = scalar_lea.vmem %s0, 9
  %s164 = smov 192
  %v165 = vld [vmem:[%s163] ss:$16 sm:%s164]
  %vm166 = vcmask 1047558
  %v167 = vsel %vm166, %v165, %v162
  %168 = vrot.lane.b32.xlu0 %v167, 72
  %v169 = vpop.permute.xlu0 %168
  %vm170 = vcmask 654912
  %171 = vst.msk [vmem:[%s1] sm:$0xff] %vm170, %v169
  %s172 = scalar_lea.vmem %s0, 8
  %s173 = smov 3
  %v174 = vld [vmem:[%s172] ss:$16 sm:%s173]
  %s175 = scalar_lea.vmem %s0, 8
  %s176 = smov 12
  %v177 = vld [vmem:[%s175] ss:$16 sm:%s176]
  %vm178 = vcmask 1043458
  %v179 = vsel %vm178, %v177, %v174
  %s180 = scalar_lea.vmem %s0, 8
  %s181 = smov 48
  %v182 = vld [vmem:[%s180] ss:$16 sm:%s181]
  %vm183 = vcmask 1045508
  %v184 = vsel %vm183, %v182, %v179
  %s185 = scalar_lea.vmem %s0, 8
  %s186 = smov 192
  %v187 = vld [vmem:[%s185] ss:$16 sm:%s186]
  %vm188 = vcmask 1047558
  %v189 = vsel %vm188, %v187, %v184
  %190 = vrot.lane.b32.xlu0 %v189, 64
  %v191 = vpop.permute.xlu0 %190
  %vm192 = vcmask 589312
  %193 = vst.msk [vmem:[%s1] sm:$0xff] %vm192, %v191
  %s194 = scalar_lea.vmem %s0, 7
  %s195 = smov 3
  %v196 = vld [vmem:[%s194] ss:$16 sm:%s195]
  %s197 = scalar_lea.vmem %s0, 7
  %s198 = smov 12
  %v199 = vld [vmem:[%s197] ss:$16 sm:%s198]
  %vm200 = vcmask 1043458
  %v201 = vsel %vm200, %v199, %v196
  %s202 = scalar_lea.vmem %s0, 7
  %s203 = smov 48
  %v204 = vld [vmem:[%s202] ss:$16 sm:%s203]
  %vm205 = vcmask 1045508
  %v206 = vsel %vm205, %v204, %v201
  %s207 = scalar_lea.vmem %s0, 7
  %s208 = smov 192
  %v209 = vld [vmem:[%s207] ss:$16 sm:%s208]
  %vm210 = vcmask 1047558
  %v211 = vsel %vm210, %v209, %v206
  %212 = vrot.lane.b32.xlu0 %v211, 56
  %v213 = vpop.permute.xlu0 %212
  %vm214 = vcmask 523712
  %215 = vst.msk [vmem:[%s1] sm:$0xff] %vm214, %v213
  %s216 = scalar_lea.vmem %s0, 6
  %s217 = smov 3
  %v218 = vld [vmem:[%s216] ss:$16 sm:%s217]
  %s219 = scalar_lea.vmem %s0, 6
  %s220 = smov 12
  %v221 = vld [vmem:[%s219] ss:$16 sm:%s220]
  %vm222 = vcmask 1043458
  %v223 = vsel %vm222, %v221, %v218
  %s224 = scalar_lea.vmem %s0, 6
  %s225 = smov 48
  %v226 = vld [vmem:[%s224] ss:$16 sm:%s225]
  %vm227 = vcmask 1045508
  %v228 = vsel %vm227, %v226, %v223
  %s229 = scalar_lea.vmem %s0, 6
  %s230 = smov 192
  %v231 = vld [vmem:[%s229] ss:$16 sm:%s230]
  %vm232 = vcmask 1047558
  %v233 = vsel %vm232, %v231, %v228
  %234 = vrot.lane.b32.xlu0 %v233, 48
  %v235 = vpop.permute.xlu0 %234
  %vm236 = vcmask 458112
  %237 = vst.msk [vmem:[%s1] sm:$0xff] %vm236, %v235
  %s238 = scalar_lea.vmem %s0, 5
  %s239 = smov 3
  %v240 = vld [vmem:[%s238] ss:$16 sm:%s239]
  %s241 = scalar_lea.vmem %s0, 5
  %s242 = smov 12
  %v243 = vld [vmem:[%s241] ss:$16 sm:%s242]
  %vm244 = vcmask 1043458
  %v245 = vsel %vm244, %v243, %v240
  %s246 = scalar_lea.vmem %s0, 5
  %s247 = smov 48
  %v248 = vld [vmem:[%s246] ss:$16 sm:%s247]
  %vm249 = vcmask 1045508
  %v250 = vsel %vm249, %v248, %v245
  %s251 = scalar_lea.vmem %s0, 5
  %s252 = smov 192
  %v253 = vld [vmem:[%s251] ss:$16 sm:%s252]
  %vm254 = vcmask 1047558
  %v255 = vsel %vm254, %v253, %v250
  %256 = vrot.lane.b32.xlu0 %v255, 40
  %v257 = vpop.permute.xlu0 %256
  %vm258 = vcmask 392512
  %259 = vst.msk [vmem:[%s1] sm:$0xff] %vm258, %v257
  %s260 = scalar_lea.vmem %s0, 4
  %s261 = smov 3
  %v262 = vld [vmem:[%s260] ss:$16 sm:%s261]
  %s263 = scalar_lea.vmem %s0, 4
  %s264 = smov 12
  %v265 = vld [vmem:[%s263] ss:$16 sm:%s264]
  %vm266 = vcmask 1043458
  %v267 = vsel %vm266, %v265, %v262
  %s268 = scalar_lea.vmem %s0, 4
  %s269 = smov 48
  %v270 = vld [vmem:[%s268] ss:$16 sm:%s269]
  %vm271 = vcmask 1045508
  %v272 = vsel %vm271, %v270, %v267
  %s273 = scalar_lea.vmem %s0, 4
  %s274 = smov 192
  %v275 = vld [vmem:[%s273] ss:$16 sm:%s274]
  %vm276 = vcmask 1047558
  %v277 = vsel %vm276, %v275, %v272
  %278 = vrot.lane.b32.xlu0 %v277, 32
  %v279 = vpop.permute.xlu0 %278
  %vm280 = vcmask 326912
  %281 = vst.msk [vmem:[%s1] sm:$0xff] %vm280, %v279
  %s282 = scalar_lea.vmem %s0, 3
  %s283 = smov 3
  %v284 = vld [vmem:[%s282] ss:$16 sm:%s283]
  %s285 = scalar_lea.vmem %s0, 3
  %s286 = smov 12
  %v287 = vld [vmem:[%s285] ss:$16 sm:%s286]
  %vm288 = vcmask 1043458
  %v289 = vsel %vm288, %v287, %v284
  %s290 = scalar_lea.vmem %s0, 3
  %s291 = smov 48
  %v292 = vld [vmem:[%s290] ss:$16 sm:%s291]
  %vm293 = vcmask 1045508
  %v294 = vsel %vm293, %v292, %v289
  %s295 = scalar_lea.vmem %s0, 3
  %s296 = smov 192
  %v297 = vld [vmem:[%s295] ss:$16 sm:%s296]
  %vm298 = vcmask 1047558
  %v299 = vsel %vm298, %v297, %v294
  %300 = vrot.lane.b32.xlu0 %v299, 24
  %v301 = vpop.permute.xlu0 %300
  %vm302 = vcmask 261312
  %303 = vst.msk [vmem:[%s1] sm:$0xff] %vm302, %v301
  %s304 = scalar_lea.vmem %s0, 2
  %s305 = smov 3
  %v306 = vld [vmem:[%s304] ss:$16 sm:%s305]
  %s307 = scalar_lea.vmem %s0, 2
  %s308 = smov 12
  %v309 = vld [vmem:[%s307] ss:$16 sm:%s308]
  %vm310 = vcmask 1043458
  %v311 = vsel %vm310, %v309, %v306
  %s312 = scalar_lea.vmem %s0, 2
  %s313 = smov 48
  %v314 = vld [vmem:[%s312] ss:$16 sm:%s313]
  %vm315 = vcmask 1045508
  %v316 = vsel %vm315, %v314, %v311
  %s317 = scalar_lea.vmem %s0, 2
  %s318 = smov 192
  %v319 = vld [vmem:[%s317] ss:$16 sm:%s318]
  %vm320 = vcmask 1047558
  %v321 = vsel %vm320, %v319, %v316
  %322 = vrot.lane.b32.xlu0 %v321, 16
  %v323 = vpop.permute.xlu0 %322
  %vm324 = vcmask 195712
  %325 = vst.msk [vmem:[%s1] sm:$0xff] %vm324, %v323
  %s326 = scalar_lea.vmem %s0, 1
  %s327 = smov 3
  %v328 = vld [vmem:[%s326] ss:$16 sm:%s327]
  %s329 = scalar_lea.vmem %s0, 1
  %s330 = smov 12
  %v331 = vld [vmem:[%s329] ss:$16 sm:%s330]
  %vm332 = vcmask 1043458
  %v333 = vsel %vm332, %v331, %v328
  %s334 = scalar_lea.vmem %s0, 1
  %s335 = smov 48
  %v336 = vld [vmem:[%s334] ss:$16 sm:%s335]
  %vm337 = vcmask 1045508
  %v338 = vsel %vm337, %v336, %v333
  %s339 = scalar_lea.vmem %s0, 1
  %s340 = smov 192
  %v341 = vld [vmem:[%s339] ss:$16 sm:%s340]
  %vm342 = vcmask 1047558
  %v343 = vsel %vm342, %v341, %v338
  %344 = vrot.lane.b32.xlu0 %v343, 8
  %v345 = vpop.permute.xlu0 %344
  %vm346 = vcmask 130112
  %347 = vst.msk [vmem:[%s1] sm:$0xff] %vm346, %v345

// kernel: downsample_conv_block.1
$region0: #{downsample_conv_block.1}
  #allocation0 [shape = 'u32[]', space=smem, size = 0x4, offset = 0x4, fixed_abs, tag = 'smem constant byte address 0x4 - core index']
  #allocation1 [shape = 'u32[144,128]{1,0:T(1,128)}', space=vmem, size = 0x12000, scoped, tag = 'internal scratch']
  #allocation2 [shape = 'bf16[32,192]{1,0:T(16,128)(2,1)}', space=vmem, size = 0x4000, scoped, tag = 'scratch operand']
  %s0 = inlined_call_operand.vmem [shape: bf16[32,64], index: 0, kind: input, shape index: {}]
  %s1 = inlined_call_operand.vmem [shape: bf16[192,128], index: 1, kind: input, shape index: {}]
  %s2 = inlined_call_operand.vmem [shape: f32[128,8], index: 2, kind: input, shape index: {}]
  %s3 = inlined_call_operand.vmem [shape: f32[8,128], index: 3, kind: input, shape index: {}]
  %s4 = inlined_call_operand.vmem [shape: f32[1,8], index: 4, kind: input, shape index: {}]
  %s5 = inlined_call_operand.vmem [shape: f32[1,8], index: 5, kind: input, shape index: {}]
  %s6 = inlined_call_operand.vmem [shape: f32[32,128], index: 6, kind: output, shape index: {}]
  %s7 = sld [smem:[#allocation0]]
  $region34: #{downsample_conv_block.1} parent=0
    _
  %s9 = ssub.s32 1, %s7
  %s10 = scalar_select 0, %s9, %s7
  // Predicated region
  $region2: #{downsample_conv_block.1} parent=0 // pred_check
    _
  $region3: #{downsample_conv_block.1} parent=0 // pred_check_branch
    %12 = sbr.rel (0) target = $region5
  $region4: #{downsample_conv_block.1} parent=0 // pred_region
    _
  $region5: #{downsample_conv_block.1} parent=0 // pred_fallthru
    _
  // Predicated region
  $region6: #{downsample_conv_block.1} parent=0 // pred_check
    _
  $region7: #{downsample_conv_block.1} parent=0 // pred_check_branch
    %14 = sbr.rel (0) target = $region9
  $region8: #{downsample_conv_block.1} parent=0 // pred_region
    _
  $region9: #{downsample_conv_block.1} parent=0 // pred_fallthru
    _
  // Predicated region
  $region10: #{downsample_conv_block.1} parent=0 // pred_check
    _
  $region11: #{downsample_conv_block.1} parent=0 // pred_check_branch
    %16 = sbr.rel (0) target = $region13
  $region12: #{downsample_conv_block.1} parent=0 // pred_region
    _
  $region13: #{downsample_conv_block.1} parent=0 // pred_fallthru
    _
  // Predicated region
  $region14: #{downsample_conv_block.1} parent=0 // pred_check
    _
  $region15: #{downsample_conv_block.1} parent=0 // pred_check_branch
    %18 = sbr.rel (0) target = $region17
  $region16: #{downsample_conv_block.1} parent=0 // pred_region
    _
  $region17: #{downsample_conv_block.1} parent=0 // pred_fallthru
    _
  // Predicated region
  $region18: #{downsample_conv_block.1} parent=0 // pred_check
    _
  $region19: #{downsample_conv_block.1} parent=0 // pred_check_branch
    %20 = sbr.rel (0) target = $region21
  $region20: #{downsample_conv_block.1} parent=0 // pred_region
    _
  $region21: #{downsample_conv_block.1} parent=0 // pred_fallthru
    _
  // Predicated region
  $region22: #{downsample_conv_block.1} parent=0 // pred_check
    _
  $region23: #{downsample_conv_block.1} parent=0 // pred_check_branch
    %22 = sbr.rel (0) target = $region25
  $region24: #{downsample_conv_block.1} parent=0 // pred_region
    _
  $region25: #{downsample_conv_block.1} parent=0 // pred_fallthru
    _
  %v24 = vld [vmem:[%s0] sm:$0xf]
  %v25 = vld [vmem:[%s0 + $0x4] sm:$0xf]
  %v28 = vunpack.c.l.b16 %v24
  %v29 = vunpack.c.l.b16 %v25
  %v30 = vpack.c.b16 %v29, %v28
  %31 = vrot.lane.b32.xlu0 %v30, 64
  %v32 = vpop.permute.xlu0 %31
  %vm34 = vcmask 1048064
  %35 = vst.msk [vmem:[#allocation2] sm:$0xff] %vm34, %v32
  %v37 = vshrl.u32 %v30, 16
  %v39 = vrot.slane %v37, 7
  %v40 = vshll.u32 %v30, 16
  %v42 = vor.u32 %v39, %v40
  %vm44 = vcmask 523264
  %vm45 = vsmask.f32 7938
  %vm46 = vmand %vm44, %vm45
  %v47 = vld [vmem:[#allocation2] sm:$0xff]
  %v48 = vsel %vm46, %v42, %v47
  %49 = vst [vmem:[#allocation2] sm:$0xff] %v48
  %v50 = vpack.c.b16 %v28, %v28
  %v52 = vshrl.u32 %v50, 16
  %vm55 = vcmask 516096
  %vm56 = vsmask.f32 256
  %vm57 = vmand %vm55, %vm56
  %v58 = vld [vmem:[#allocation2] sm:$0x1]
  %v59 = vsel %vm57, %v52, %v58
  %60 = vst [vmem:[#allocation2] sm:$0x1] %v59
  %v61 = vrot.slane %v40, 1
  %v62 = vor.u32 %v37, %v61
  %vm64 = vsmask.f32 7424
  %vm65 = vmand %vm44, %vm64
  %v66 = vld [vmem:[#allocation2 + $0x8] sm:$0xff]
  %v67 = vsel %vm65, %v62, %v66
  %68 = vst [vmem:[#allocation2 + $0x8] sm:$0xff] %v67
  %v69 = vpack.c.b16 %v29, %v29
  %v71 = vshll.u32 %v69, 16
  %v73 = vrot.slane %v71, 4
  %vm75 = vcmask 523271
  %vm76 = vsmask.f32 7966
  %vm77 = vmand %vm75, %vm76
  %v78 = vld [vmem:[#allocation2 + $0x8] sm:$0x80]
  %v79 = vsel %vm77, %v73, %v78
  %80 = vst [vmem:[#allocation2 + $0x8] sm:$0x80] %v79
  %v81 = vld [vmem:[%s0 + $0x8] sm:$0xf]
  %v82 = vld [vmem:[%s0 + $0xc] sm:$0xf]
  %v85 = vunpack.c.l.b16 %v81
  %v86 = vunpack.c.l.b16 %v82
  %v87 = vpack.c.b16 %v86, %v85
  %88 = vrot.lane.b32.xlu0 %v87, 64
  %v89 = vpop.permute.xlu0 %88
  %91 = vst.msk [vmem:[#allocation2 + $0x10] sm:$0xff] %vm34, %v89
  %v93 = vshrl.u32 %v87, 16
  %v95 = vrot.slane %v93, 7
  %v96 = vshll.u32 %v87, 16
  %v98 = vor.u32 %v95, %v96
  %v100 = vld [vmem:[#allocation2 + $0x10] sm:$0xff]
  %v101 = vsel %vm46, %v98, %v100
  %102 = vst [vmem:[#allocation2 + $0x10] sm:$0xff] %v101
  %v103 = vpack.c.b16 %v85, %v85
  %v105 = vshrl.u32 %v103, 16
  %v108 = vld [vmem:[#allocation2 + $0x10] sm:$0x1]
  %v109 = vsel %vm57, %v105, %v108
  %110 = vst [vmem:[#allocation2 + $0x10] sm:$0x1] %v109
  %v111 = vrot.slane %v96, 1
  %v112 = vor.u32 %v93, %v111
  %v114 = vld [vmem:[#allocation2 + $0x18] sm:$0xff]
  %v115 = vsel %vm65, %v112, %v114
  %116 = vst [vmem:[#allocation2 + $0x18] sm:$0xff] %v115
  %v117 = vpack.c.b16 %v86, %v86
  %v119 = vshll.u32 %v117, 16
  %v121 = vrot.slane %v119, 4
  %v123 = vld [vmem:[#allocation2 + $0x18] sm:$0x80]
  %v124 = vsel %vm77, %v121, %v123
  %125 = vst [vmem:[#allocation2 + $0x18] sm:$0x80] %v124
  %v126 = vld [vmem:[#allocation2] sm:$0xff]
  %v127 = vld [vmem:[#allocation2 + $0x8] sm:$0xff]
  %v128 = vld [vmem:[#allocation2 + $0x10] sm:$0xff]
  %v129 = vld [vmem:[#allocation2 + $0x18] sm:$0xff]
  %v130 = vld [vmem:[%s1] sm:$0xf]
  %v131 = vld [vmem:[%s1 + $0x4] sm:$0xf]
  %v132 = vld [vmem:[%s1 + $0x8] sm:$0xf]
  %v133 = vld [vmem:[%s1 + $0xc] sm:$0xf]
  %v134 = vld [vmem:[%s1 + $0x10] sm:$0xf]
  %v135 = vld [vmem:[%s1 + $0x14] sm:$0xf]
  %v136 = vld [vmem:[%s1 + $0x18] sm:$0xf]
  %v137 = vld [vmem:[%s1 + $0x1c] sm:$0xf]
  %v138 = vld [vmem:[%s1 + $0x20] sm:$0xf]
  %v139 = vld [vmem:[%s1 + $0x24] sm:$0xf]
  %v140 = vld [vmem:[%s1 + $0x28] sm:$0xf]
  %v141 = vld [vmem:[%s1 + $0x2c] sm:$0xf]
  %v142 = vld [vmem:[%s1 + $0x30] sm:$0xf]
  %v143 = vld [vmem:[%s1 + $0x34] sm:$0xf]
  %v144 = vld [vmem:[%s1 + $0x38] sm:$0xf]
  %v145 = vld [vmem:[%s1 + $0x3c] sm:$0xf]
  %v146 = vld [vmem:[%s1 + $0x40] sm:$0xf]
  %v147 = vld [vmem:[%s1 + $0x44] sm:$0xf]
  %v148 = vld [vmem:[%s1 + $0x48] sm:$0xf]
  %v149 = vld [vmem:[%s1 + $0x4c] sm:$0xf]
  %v150 = vld [vmem:[%s1 + $0x50] sm:$0xf]
  %v151 = vld [vmem:[%s1 + $0x54] sm:$0xf]
  %v152 = vld [vmem:[%s1 + $0x58] sm:$0xf]
  %v153 = vld [vmem:[%s1 + $0x5c] sm:$0xf]
  %v178 = vunpack.c.l.b16 %v130
  %v179 = vunpack.c.l.b16 %v131
  %v180 = vunpack.c.l.b16 %v132
  %v181 = vunpack.c.l.b16 %v133
  %v182 = vunpack.c.l.b16 %v134
  %v183 = vunpack.c.l.b16 %v135
  %v184 = vunpack.c.l.b16 %v136
  %v185 = vunpack.c.l.b16 %v137
  %v186 = vunpack.c.l.b16 %v138
  %v187 = vunpack.c.l.b16 %v139
  %v188 = vunpack.c.l.b16 %v140
  %v189 = vunpack.c.l.b16 %v141
  %v190 = vunpack.c.l.b16 %v142
  %v191 = vunpack.c.l.b16 %v143
  %v192 = vunpack.c.l.b16 %v144
  %v193 = vunpack.c.l.b16 %v145
  %v194 = vunpack.c.l.b16 %v146
  %v195 = vunpack.c.l.b16 %v147
  %v196 = vunpack.c.l.b16 %v148
  %v197 = vunpack.c.l.b16 %v149
  %v198 = vunpack.c.l.b16 %v150
  %v199 = vunpack.c.l.b16 %v151
  %v200 = vunpack.c.l.b16 %v152
  %v201 = vunpack.c.l.b16 %v153
  %v202 = vpack.c.b16 %v179, %v178
  %v203 = vpack.c.b16 %v181, %v180
  %v204 = vpack.c.b16 %v183, %v182
  %v205 = vpack.c.b16 %v185, %v184
  %v206 = vpack.c.b16 %v187, %v186
  %v207 = vpack.c.b16 %v189, %v188
  %v208 = vpack.c.b16 %v191, %v190
  %v209 = vpack.c.b16 %v193, %v192
  %v210 = vpack.c.b16 %v195, %v194
  %v211 = vpack.c.b16 %v197, %v196
  %v212 = vpack.c.b16 %v199, %v198
  %v213 = vpack.c.b16 %v201, %v200
  %vm226 = vcmask 523264
  %v228 = vsel %vm226, %v127, 0
  %v231 = vsel %vm226, %v129, 0
  %233 = vmatprep.subr.bf16.mxu0 0
  %234 = vmatpush1.bf16.msra.mxu0 %v202
  %235 = vmatprep.subr.bf16.mxu0 0
  %236 = vmatpush1.bf16.msra.mxu0 %v203
  %237 = vmatprep.subr.bf16.mxu0 0
  %238 = vmatpush1.bf16.msra.mxu0 %v204
  %239 = vmatprep.subr.bf16.mxu0 0
  %240 = vmatpush1.bf16.msra.mxu0 %v205
  %241 = vmatprep.subr.bf16.mxu0 0
  %242 = vmatpush1.bf16.msra.mxu0 %v206
  %243 = vmatprep.subr.bf16.mxu0 0
  %244 = vmatpush1.bf16.msra.mxu0 %v207
  %245 = vmatprep.subr.bf16.mxu0 0
  %246 = vmatpush1.bf16.msra.mxu0 %v208
  %247 = vmatprep.subr.bf16.mxu0 0
  %248 = vmatpush1.bf16.msra.mxu0 %v209
  %249 = vmatprep.subr.bf16.mxu0 0
  %250 = vmatpush1.bf16.msra.mxu0 %v210
  %251 = vmatprep.subr.bf16.mxu0 0
  %252 = vmatpush1.bf16.msra.mxu0 %v211
  %253 = vmatprep.subr.bf16.mxu0 0
  %254 = vmatpush1.bf16.msra.mxu0 %v212
  %255 = vmatprep.subr.bf16.mxu0 0
  %256 = vmatpush1.bf16.msra.mxu0 %v213
  %257 = vmatprep.subr.bf16.mxu0 0
  %258 = vmatpush1.bf16.msra.mxu0 0
  %259 = vmatprep.subr.bf16.mxu0 0
  %260 = vmatpush1.bf16.msra.mxu0 0
  %261 = vmatprep.subr.bf16.mxu0 0
  %262 = vmatpush1.bf16.msra.mxu0 0
  %263 = vmatprep.subr.bf16.mxu0 0
  %264 = vmatpush1.bf16.msra.mxu0 0
  %265 = vmatprep.mubr.bf16.mxu0 %v228
  %266 = vmatmul.mubr.bf16.gmra.mrb[0].mxu0 %v126
  %v267 = vpop.f32.mrb[0].mxu0
  %v268 = vadd.f32 0.0, %v267
  %v269 = vpop.f32.mrb[0].mxu0
  %v270 = vpop.f32.mrb[0].mxu0
  %v271 = vadd.f32 0.0, %v270
  %v272 = vpop.f32.mrb[0].mxu0
  %273 = vmatprep.mubr.bf16.mxu0 %v231
  %274 = vmatmul.mubr.bf16.gmra.mrb[0].mxu0 %v128
  %v275 = vpop.f32.mrb[0].mxu0
  %v276 = vadd.f32 0.0, %v275
  %v277 = vpop.f32.mrb[0].mxu0
  %v278 = vpop.f32.mrb[0].mxu0
  %v279 = vadd.f32 0.0, %v278
  %v280 = vpop.f32.mrb[0].mxu0
  %281 = vdwg.mxu0
  %v282 = vadd.f32 %v268, %v271
  %v283 = vadd.f32 %v282, %v276
  %v284 = vadd.f32 %v283, %v279
  %v285 = vrot.slane %v284, 4
  %v286 = vadd.f32 %v284, %v285
  %v287 = vrot.slane %v286, 2
  %v288 = vadd.f32 %v286, %v287
  %v289 = vrot.slane %v288, 1
  %v290 = vadd.f32 %v288, %v289
  %v291 = vmul.f32 %v268, %v268
  %v292 = vmul.f32 %v271, %v271
  %v293 = vmul.f32 %v276, %v276
  %v294 = vmul.f32 %v279, %v279
  %v295 = vadd.f32 %v291, %v292
  %v296 = vadd.f32 %v295, %v293
  %v297 = vadd.f32 %v296, %v294
  %v298 = vrot.slane %v297, 4
  %v299 = vadd.f32 %v297, %v298
  %v300 = vrot.slane %v299, 2
  %v301 = vadd.f32 %v299, %v300
  %v302 = vrot.slane %v301, 1
  %v303 = vadd.f32 %v301, %v302
  %vm304 = vcmask 1040384
  %v305 = vsel %vm304, %v290, %v303
  %v306 = vld [vmem:[%s2] sm:$0xff]
  %v307 = vld [vmem:[%s2 + $0x8] sm:$0xff]
  %v308 = vld [vmem:[%s2 + $0x10] sm:$0xff]
  %v309 = vld [vmem:[%s2 + $0x18] sm:$0xff]
  %v310 = vld [vmem:[%s2 + $0x20] sm:$0xff]
  %v311 = vld [vmem:[%s2 + $0x28] sm:$0xff]
  %v312 = vld [vmem:[%s2 + $0x30] sm:$0xff]
  %v313 = vld [vmem:[%s2 + $0x38] sm:$0xff]
  %v314 = vld [vmem:[%s2 + $0x40] sm:$0xff]
  %v315 = vld [vmem:[%s2 + $0x48] sm:$0xff]
  %v316 = vld [vmem:[%s2 + $0x50] sm:$0xff]
  %v317 = vld [vmem:[%s2 + $0x58] sm:$0xff]
  %v318 = vld [vmem:[%s2 + $0x60] sm:$0xff]
  %v319 = vld [vmem:[%s2 + $0x68] sm:$0xff]
  %v320 = vld [vmem:[%s2 + $0x70] sm:$0xff]
  %v321 = vld [vmem:[%s2 + $0x78] sm:$0xff]
  %322 = vmatprep.subr.mxu0 0.0
  %323 = vmatpush1.msra.mxu0 %v306
  %324 = vmatprep.subr.mxu0 0.0
  %325 = vmatpush1.msra.mxu0 %v307
  %326 = vmatprep.subr.mxu0 0.0
  %327 = vmatpush1.msra.mxu0 %v308
  %328 = vmatprep.subr.mxu0 0.0
  %329 = vmatpush1.msra.mxu0 %v309
  %330 = vmatprep.subr.mxu0 0.0
  %331 = vmatpush1.msra.mxu0 %v310
  %332 = vmatprep.subr.mxu0 0.0
  %333 = vmatpush1.msra.mxu0 %v311
  %334 = vmatprep.subr.mxu0 0.0
  %335 = vmatpush1.msra.mxu0 %v312
  %336 = vmatprep.subr.mxu0 0.0
  %337 = vmatpush1.msra.mxu0 %v313
  %338 = vmatprep.subr.mxu0 0.0
  %339 = vmatpush1.msra.mxu0 %v314
  %340 = vmatprep.subr.mxu0 0.0
  %341 = vmatpush1.msra.mxu0 %v315
  %342 = vmatprep.subr.mxu0 0.0
  %343 = vmatpush1.msra.mxu0 %v316
  %344 = vmatprep.subr.mxu0 0.0
  %345 = vmatpush1.msra.mxu0 %v317
  %346 = vmatprep.subr.mxu0 0.0
  %347 = vmatpush1.msra.mxu0 %v318
  %348 = vmatprep.subr.mxu0 0.0
  %349 = vmatpush1.msra.mxu0 %v319
  %350 = vmatprep.subr.mxu0 0.0
  %351 = vmatpush1.msra.mxu0 %v320
  %352 = vmatprep.subr.mxu0 0.0
  %353 = vmatpush1.msra.mxu0 %v321
  %354 = vmatprep.subr.mxu0 0.0
  %355 = vmatpush1.msra.mxu0 0.0
  %356 = vmatprep.subr.mxu0 0.0
  %357 = vmatpush1.msra.mxu0 0.0
  %358 = vmatprep.subr.mxu0 0.0
  %359 = vmatpush1.msra.mxu0 0.0
  %360 = vmatprep.subr.mxu0 0.0
  %361 = vmatpush1.msra.mxu0 0.0
  %362 = vmatprep.subr.mxu0 0.0
  %363 = vmatpush1.msra.mxu0 0.0
  %364 = vmatprep.subr.mxu0 0.0
  %365 = vmatpush1.msra.mxu0 0.0
  %366 = vmatprep.subr.mxu0 0.0
  %367 = vmatpush1.msra.mxu0 0.0
  %368 = vmatprep.subr.mxu0 0.0
  %369 = vmatpush1.msra.mxu0 0.0
  %370 = vmatprep.subr.mxu0 0.0
  %371 = vmatpush1.msra.mxu0 0.0
  %372 = vmatprep.subr.mxu0 0.0
  %373 = vmatpush1.msra.mxu0 0.0
  %374 = vmatprep.subr.mxu0 0.0
  %375 = vmatpush1.msra.mxu0 0.0
  %376 = vmatprep.subr.mxu0 0.0
  %377 = vmatpush1.msra.mxu0 0.0
  %378 = vmatprep.subr.mxu0 0.0
  %379 = vmatpush1.msra.mxu0 0.0
  %380 = vmatprep.subr.mxu0 0.0
  %381 = vmatpush1.msra.mxu0 0.0
  %382 = vmatprep.subr.mxu0 0.0
  %383 = vmatpush1.msra.mxu0 0.0
  %384 = vmatprep.subr.mxu0 0.0
  %385 = vmatpush1.msra.mxu0 0.0
  %386 = vmatprep.mubr.f32.mxu0 0.0
  %387 = vmatmul.mubr.f32.gmra.mrb[0].mxu0 %v305
  %v388 = vpop.f32.mrb[0].mxu0
  %v389 = vadd.f32 0.0, %v388
  %v390 = vpop.f32.mrb[0].mxu0
  %391 = vdwg.mxu0
  %v392 = vmul.f32 %v389, 0.001953125
  %v393 = vmul.f32 %v392, %v392
  %v395 = vrot.slane %v393, 7
  %v397 = vsub.f32 %v392, %v395
  %v398 = vmax.f32 %v397, 0.0
  %v399 = vld [vmem:[%s4] sm:$0x1]
  %v400 = vadd.f32 %v398, 1e-05
  %v401 = vrsqrt.pop %v400
  %v404 = vunpack.c.l.s4 1966171168
  %v405 = vunpack.c.0.s8 %v404
  %v406 = vlaneseq
  %v407 = vshrl.u32 %v406, 7
  %v408 = vsub.s32 %v405, %v407
  %v409 = vrot.slane %v401, %v408
  %v410 = vcombine.high %v409, %v409
  %v412 = vunpack.c.l.s4 1966171168
  %v413 = vunpack.c.0.s8 %v412
  %v414 = vlaneseq
  %v415 = vshrl.u32 %v414, 7
  %v416 = vsub.s32 %v413, %v415
  %v417 = vrot.slane %v410, %v416
  %v419 = vmul.f32 %v399, %v417
  %v420 = vld [vmem:[%s5] sm:$0x1]
  %v421 = vmul.f32 %v392, %v419
  %v422 = vsub.f32 %v420, %v421
  %v424 = vlaneseq
  %v425 = vshrl.u32 %v424, 7
  %v426 = vsub.s32 0, %v425
  %v427 = vrot.slane %v422, %v426
  %v429 = vsel %vm304, %v419, %v427
  %v430 = vld [vmem:[%s3] sm:$0xff]
  %vm431 = vcmask 64512
  %v433 = vsel %vm431, %v429, 0
  %435 = vmatprep.subr.mxu0 0.0
  %436 = vmatpush1.msra.mxu0 %v430
  %437 = vmatprep.subr.mxu0 0.0
  %438 = vmatpush1.msra.mxu0 0.0
  %439 = vmatprep.subr.mxu0 0.0
  %440 = vmatpush1.msra.mxu0 0.0
  %441 = vmatprep.subr.mxu0 0.0
  %442 = vmatpush1.msra.mxu0 0.0
  %443 = vmatprep.subr.mxu0 0.0
  %444 = vmatpush1.msra.mxu0 0.0
  %445 = vmatprep.subr.mxu0 0.0
  %446 = vmatpush1.msra.mxu0 0.0
  %447 = vmatprep.subr.mxu0 0.0
  %448 = vmatpush1.msra.mxu0 0.0
  %449 = vmatprep.subr.mxu0 0.0
  %450 = vmatpush1.msra.mxu0 0.0
  %451 = vmatprep.subr.mxu0 0.0
  %452 = vmatpush1.msra.mxu0 0.0
  %453 = vmatprep.subr.mxu0 0.0
  %454 = vmatpush1.msra.mxu0 0.0
  %455 = vmatprep.subr.mxu0 0.0
  %456 = vmatpush1.msra.mxu0 0.0
  %457 = vmatprep.subr.mxu0 0.0
  %458 = vmatpush1.msra.mxu0 0.0
  %459 = vmatprep.subr.mxu0 0.0
  %460 = vmatpush1.msra.mxu0 0.0
  %461 = vmatprep.subr.mxu0 0.0
  %462 = vmatpush1.msra.mxu0 0.0
  %463 = vmatprep.subr.mxu0 0.0
  %464 = vmatpush1.msra.mxu0 0.0
  %465 = vmatprep.subr.mxu0 0.0
  %466 = vmatpush1.msra.mxu0 0.0
  %467 = vmatprep.subr.mxu0 0.0
  %468 = vmatpush1.msra.mxu0 0.0
  %469 = vmatprep.subr.mxu0 0.0
  %470 = vmatpush1.msra.mxu0 0.0
  %471 = vmatprep.subr.mxu0 0.0
  %472 = vmatpush1.msra.mxu0 0.0
  %473 = vmatprep.subr.mxu0 0.0
  %474 = vmatpush1.msra.mxu0 0.0
  %475 = vmatprep.subr.mxu0 0.0
  %476 = vmatpush1.msra.mxu0 0.0
  %477 = vmatprep.subr.mxu0 0.0
  %478 = vmatpush1.msra.mxu0 0.0
  %479 = vmatprep.subr.mxu0 0.0
  %480 = vmatpush1.msra.mxu0 0.0
  %481 = vmatprep.subr.mxu0 0.0
  %482 = vmatpush1.msra.mxu0 0.0
  %483 = vmatprep.subr.mxu0 0.0
  %484 = vmatpush1.msra.mxu0 0.0
  %485 = vmatprep.subr.mxu0 0.0
  %486 = vmatpush1.msra.mxu0 0.0
  %487 = vmatprep.subr.mxu0 0.0
  %488 = vmatpush1.msra.mxu0 0.0
  %489 = vmatprep.subr.mxu0 0.0
  %490 = vmatpush1.msra.mxu0 0.0
  %491 = vmatprep.subr.mxu0 0.0
  %492 = vmatpush1.msra.mxu0 0.0
  %493 = vmatprep.subr.mxu0 0.0
  %494 = vmatpush1.msra.mxu0 0.0
  %495 = vmatprep.subr.mxu0 0.0
  %496 = vmatpush1.msra.mxu0 0.0
  %497 = vmatprep.subr.mxu0 0.0
  %498 = vmatpush1.msra.mxu0 0.0
  %499 = vmatprep.mubr.f32.mxu0 0.0
  %500 = vmatmul.mubr.f32.gmra.mrb[0].mxu0 %v433
  %v501 = vpop.f32.mrb[0].mxu0
  %v502 = vadd.f32 0.0, %v501
  %v503 = vpop.f32.mrb[0].mxu0
  %504 = vdwg.mxu0
  %v505 = vlaneseq
  %v506 = vshrl.u32 %v505, 7
  %v507 = vsub.s32 0, %v506
  %v508 = vrot.slane %v502, %v507
  %v509 = vmul.f32 %v268, %v508
  %v510 = vmul.f32 %v271, %v508
  %v511 = vmul.f32 %v276, %v508
  %v512 = vmul.f32 %v279, %v508
  %v513 = vlaneseq
  %v514 = vshrl.u32 %v513, 7
  %v515 = vsub.s32 1, %v514
  %v516 = vrot.slane %v502, %v515
  %v517 = vadd.f32 %v509, %v516
  %v518 = vadd.f32 %v510, %v516
  %v519 = vadd.f32 %v511, %v516
  %v520 = vadd.f32 %v512, %v516
  %vm521 = vcmp.ge.f32.partialorder %v517, 0.0
  %vm522 = vcmp.ge.f32.partialorder %v518, 0.0
  %vm523 = vcmp.ge.f32.partialorder %v519, 0.0
  %vm524 = vcmp.ge.f32.partialorder %v520, 0.0
  %v525 = vmul.f32 %v517, 0.01
  %v526 = vmul.f32 %v518, 0.01
  %v527 = vmul.f32 %v519, 0.01
  %v528 = vmul.f32 %v520, 0.01
  %v529 = vsel %vm521, %v517, %v525
  %v530 = vsel %vm522, %v518, %v526
  %v531 = vsel %vm523, %v519, %v527
  %v532 = vsel %vm524, %v520, %v528
  %533 = vst [vmem:[%s6] sm:$0xff] %v529
  %534 = vst [vmem:[%s6 + $0x8] sm:$0xff] %v530
  %535 = vst [vmem:[%s6 + $0x10] sm:$0xff] %v531
  %536 = vst [vmem:[%s6 + $0x18] sm:$0xff] %v532
  // Predicated region
  $region26: #{downsample_conv_block.1} parent=0 // pred_check
    _
  $region27: #{downsample_conv_block.1} parent=0 // pred_check_branch
    %538 = sbr.rel (0) target = $region29
  $region28: #{downsample_conv_block.1} parent=0 // pred_region
    _
  $region29: #{downsample_conv_block.1} parent=0 // pred_fallthru
    _
  // Predicated region
  $region30: #{downsample_conv_block.1} parent=0 // pred_check
    _
  $region31: #{downsample_conv_block.1} parent=0 // pred_check_branch
    %540 = sbr.rel (0) target = $region33
  $region32: #{downsample_conv_block.1} parent=0 // pred_region
    _
  $region33: #{downsample_conv_block.1} parent=0 // pred_fallthru
    _

</llo_original>
